<compile_context>
chip_gen: v7x
topology: tpu7x:2x2x1
jax: 0.10.0
libtpu: 0.0.40
codegen_flags: <defaults>
</compile_context>

<pallas_src>
import jax
import jax.numpy as jnp
from jax.experimental import pallas as pl
from jax.experimental.pallas import tpu as pltpu


def _cdiv(a, b):
    return -(-a // b)


def _round_up(a, m):
    return _cdiv(a, m) * m


def _make_center_loss_kernel(batch_size, num_classes, tile_b, tiles_per_split):
    def kernel(x_ref, labels_ref, centers_ref, out_ref, acc_ref):
        t = pl.program_id(1)

        @pl.when(t == 0)
        def _init():
            acc_ref[...] = jnp.zeros_like(acc_ref)

        # Gather this tile's center rows with a one-hot MXU matmul (exactly one 1.0
        # per row -> no accumulation rounding; HIGHEST keeps full f32 precision).
        lbl = labels_ref[...]                                           # (tile_b, 1) int32
        classes = jax.lax.broadcasted_iota(jnp.int32, (tile_b, num_classes), 1)
        onehot = (lbl == classes).astype(jnp.float32)                   # (tile_b, C)
        centers = centers_ref[...].astype(jnp.float32)                  # (C, D), VMEM-resident
        c = jnp.dot(onehot, centers,
                    preferred_element_type=jnp.float32,
                    precision=jax.lax.Precision.HIGHEST)                # (tile_b, D)

        # Exact per-sample squared distance on the VPU (no catastrophic cancellation).
        xv = x_ref[...].astype(jnp.float32)                             # in-kernel upcast
        diff = xv - c
        d = jnp.sum(diff * diff, axis=1, keepdims=True)                 # (tile_b, 1)
        d = jnp.clip(d, 1e-12, 1e12)        # PyTorch clamps the label entries too

        # Mask batch-padding / out-of-bounds tail rows with where (so undefined data
        # in partial boundary blocks cannot propagate), accumulate into persistent
        # per-row scratch; collapse to a scalar only at finalize.
        base = (pl.program_id(0) * tiles_per_split + t) * tile_b
        row = base + jax.lax.broadcasted_iota(jnp.int32, (tile_b, 1), 0)
        acc_ref[...] += jnp.where(row < batch_size, d, 0.0)

        @pl.when(t == pl.num_programs(1) - 1)
        def _finalize():
            out_ref[...] = jnp.sum(acc_ref[...], keepdims=True).reshape(1, 1, 1)

    return kernel


def center_loss(x, centers, labels, *,
                target_block_bytes=1 << 20,   # ~1 MiB x block per pipeline buffer
                max_tile_b=2048,
                num_splits=2):                # 2-way batch split -> both TCs on v7x
    """x: (B, D), centers: (C, D), labels: (B,) int  ->  scalar float32 loss."""
    B, D = x.shape
    C, D2 = centers.shape
    assert D == D2

    x_item = jnp.dtype(x.dtype).itemsize
    c_item = jnp.dtype(centers.dtype).itemsize
    sub = {4: 8, 2: 16, 1: 32}.get(x_item, 8)      # sublane packing for x's dtype

    # Batch tile: as large as the block-byte target allows (mem-bound kernel; tiny
    # tiles are grid-overhead bound), sublane-aligned, no larger than needed.
    cap = max(sub, (target_block_bytes // max(1, D * x_item)) // sub * sub)
    tile_b = int(max(sub, min(cap, max_tile_b, _round_up(B, sub))))

    # VMEM budget (conservative for v7x's 64 MiB physical): resident centers
    # (x2 pipeline buffers) + double-buffered x/label blocks + accumulator +
    # in-kernel temporaries (one-hot, f32 casts, diff).
    def vmem_need(tb):
        temps = tb * C * 4 + C * D * 4 + 3 * tb * D * 4
        return (2 * C * D * c_item + 2 * tb * D * x_item + 2 * tb * 4
                + tb * 128 * 4 + temps + (1 << 20))

    vmem_budget = 44 << 20
    while tile_b > sub and vmem_need(tile_b) > vmem_budget:
        tile_b = max(sub, (tile_b // 2) // sub * sub)
    if vmem_need(tile_b) > vmem_budget:
        # TODO(synk): double-buffered HBM row-gather fallback for center tables too
        # large to keep VMEM-resident (cap ~8-16 MiB on v7x).
        raise NotImplementedError(
            "centers table too large for the VMEM-resident one-hot gather path")

    num_blocks = _cdiv(B, tile_b)
    splits = num_splits if num_blocks >= num_splits else 1
    tps = _cdiv(num_blocks, splits)                # inner grid length per split
    last_block = num_blocks - 1

    # Labels (tiny) are the only padded array; x / centers are streamed unpadded
    # and uncast, so no extra HBM pass over the dominant input.
    b_pad = splits * tps * tile_b
    labels2d = labels.astype(jnp.int32).reshape(B, 1)
    if b_pad != B:
        labels2d = jnp.pad(labels2d, ((0, b_pad - B), (0, 0)))  # class 0: in-bounds

    kernel = _make_center_loss_kernel(B, C, tile_b, tps)

    def x_map(c, t):
        # Clamp so blocks past the end of x (from split/tile padding) re-read the
        # last (possibly partial) block; those rows are masked out in-kernel.
        return (jnp.minimum(c * tps + t, last_block), 0)

    out = pl.pallas_call(
        kernel,
        out_shape=jax.ShapeDtypeStruct((splits, 1, 1), jnp.float32),
        grid=(splits, tps),
        in_specs=[
            pl.BlockSpec((tile_b, D), x_map),                          # x: streamed, native dtype
            pl.BlockSpec((tile_b, 1), lambda c, t: (c * tps + t, 0)),  # labels
            pl.BlockSpec((C, D), lambda c, t: (0, 0)),                 # centers: VMEM-resident
        ],
        out_specs=pl.BlockSpec((1, 1, 1), lambda c, t: (c, 0, 0)),     # per-split partial sum
        scratch_shapes=[pltpu.VMEM((tile_b, 1), jnp.float32)],
        compiler_params=pltpu.CompilerParams(
            dimension_semantics=("parallel", "arbitrary"),
            vmem_limit_bytes=int(min(60 << 20,
                                     max(vmem_need(tile_b) + (8 << 20), 32 << 20))),
        ),
    )(x, labels2d, centers)

    # PyTorch clamps AFTER masking: each of the B*(C-1) masked-out (B, C) entries
    # contributes exactly 1e-12; added analytically instead of materializing (B, C).
    correction = jnp.float32(B * (C - 1) * 1e-12)
    return (jnp.sum(out) + correction) / jnp.float32(B)


def _reference_center_loss(x, centers, labels):
    # Pure-JAX reference mirroring the PyTorch forward exactly (expansion form).
    B = x.shape[0]
    C = centers.shape[0]
    distmat = (
        jnp.sum(x ** 2, axis=1, keepdims=True)
        + jnp.sum(centers ** 2, axis=1, keepdims=True).T
        - 2.0 * x @ centers.T
    )
    mask = (labels[:, None] == jnp.arange(C)[None, :]).astype(jnp.float32)
    dist = jnp.clip(distmat * mask, 1e-12, 1e12)
    return jnp.sum(dist) / B


if __name__ == "__main__":
    # Case 1: nominal small shapes.
    num_classes, feat_dim, batch_size = 16, 64, 8
    k_c, k_x, k_l = jax.random.split(jax.random.PRNGKey(0), 3)
    centers = jax.random.normal(k_c, (num_classes, feat_dim), dtype=jnp.float32)
    x = jax.random.normal(k_x, (batch_size, feat_dim), dtype=jnp.float32)
    labels = jax.random.randint(k_l, (batch_size,), 0, num_classes, dtype=jnp.int32)
    loss = center_loss(x, centers, labels)
    jax.block_until_ready(loss)
    ref = _reference_center_loss(x, centers, labels)
    assert jnp.allclose(loss, ref, rtol=1e-4, atol=1e-4), (loss, ref)

    # Case 2: batch (5) and feature (32) sizes off the (8, 128) grid.
    k_c2, k_x2, k_l2 = jax.random.split(jax.random.PRNGKey(1), 3)
    C2, D2, B2 = 10, 32, 5
    centers2 = jax.random.normal(k_c2, (C2, D2), dtype=jnp.float32)
    x2 = jax.random.normal(k_x2, (B2, D2), dtype=jnp.float32)
    labels2 = jax.random.randint(k_l2, (B2,), 0, C2, dtype=jnp.int32)
    loss2 = center_loss(x2, centers2, labels2)
    jax.block_until_ready(loss2)
    ref2 = _reference_center_loss(x2, centers2, labels2)
    assert jnp.allclose(loss2, ref2, rtol=1e-4, atol=1e-4), (loss2, ref2)

    # Case 3: multi-tile batch exercising the 2-way split, partial tail block and
    # the clamped index map (max_tile_b shrunk so there are several grid steps).
    k_c3, k_x3, k_l3 = jax.random.split(jax.random.PRNGKey(2), 3)
    C3, D3, B3 = 12, 48, 150
    centers3 = jax.random.normal(k_c3, (C3, D3), dtype=jnp.float32)
    x3 = jax.random.normal(k_x3, (B3, D3), dtype=jnp.float32)
    labels3 = jax.random.randint(k_l3, (B3,), 0, C3, dtype=jnp.int32)
    loss3 = center_loss(x3, centers3, labels3, max_tile_b=64)
    jax.block_until_ready(loss3)
    ref3 = _reference_center_loss(x3, centers3, labels3)
    assert jnp.allclose(loss3, ref3, rtol=1e-4, atol=1e-4), (loss3, ref3)

    print("KERNEL_OK")
</pallas_src>

<mosaic_0001>
module attributes {stable_mosaic.version = 11 : i64} {
  func.func @kernel(%arg0: i32, %arg1: i32, %arg2: memref<8x64xf32, #tpu.memory_space<vmem>>, %arg3: memref<8x1xi32, #tpu.memory_space<vmem>>, %arg4: memref<16x64xf32, #tpu.memory_space<vmem>>, %arg5: memref<1x1x1xf32, #tpu.memory_space<vmem>>, %arg6: memref<8x1xf32, #tpu.memory_space<vmem>>) attributes {dimension_semantics = [#tpu.dimension_semantics<parallel>, #tpu.dimension_semantics<arbitrary>], iteration_bounds = array<i64: 1, 1>, scalar_prefetch = 0 : i64, scratch_operands = 1 : i64, tpu.core_type = #tpu.core_type<tc>, window_params = [{transform_indices = @transform_0, window_bounds = array<i64: 8, 64>}, {transform_indices = @transform_1, window_bounds = array<i64: 8, 1>}, {pipeline_mode = #tpu.pipeline_mode<synchronous>, transform_indices = @transform_2, window_bounds = array<i64: 16, 64>}, {transform_indices = @transform_3, window_bounds = array<i64: 1, 1, 1>}]} {
    %c0_i32 = arith.constant 0 : i32
    %0 = arith.cmpi eq, %arg1, %c0_i32 : i32
    %1 = arith.extui %0 : i1 to i32
    %c0_i32_0 = arith.constant 0 : i32
    %2 = arith.cmpi ne, %1, %c0_i32_0 : i32
    scf.if %2 {
      %cst_17 = arith.constant 0.000000e+00 : f32
      %36 = vector.broadcast %cst_17 : f32 to vector<8x1xf32>
      %c0_18 = arith.constant 0 : index
      %c0_19 = arith.constant 0 : index
      %37 = vector.load %arg6[%c0_18, %c0_19] : memref<8x1xf32, #tpu.memory_space<vmem>>, vector<8x1xf32>
      tpu.vector_store %arg6[%c0_18, %c0_19], %36 {strides = array<i32>} : memref<8x1xf32, #tpu.memory_space<vmem>>, vector<8x1xf32>,
    } else {
    }
    %c0 = arith.constant 0 : index
    %c0_1 = arith.constant 0 : index
    %3 = vector.load %arg3[%c0, %c0_1] : memref<8x1xi32, #tpu.memory_space<vmem>>, vector<8x1xi32>
    %4 = tpu.iota {dimensions = array<i32: 1>} : vector<8x16xi32>
    %5 = vector.broadcast %3 : vector<8x1xi32> to vector<8x16xi32>
    %6 = arith.cmpi eq, %5, %4 : vector<8x16xi32>
    %7 = arith.extui %6 : vector<8x16xi1> to vector<8x16xi32>
    %8 = arith.sitofp %7 : vector<8x16xi32> to vector<8x16xf32>
    %c0_2 = arith.constant 0 : index
    %c0_3 = arith.constant 0 : index
    %9 = vector.load %arg4[%c0_2, %c0_3] : memref<16x64xf32, #tpu.memory_space<vmem>>, vector<16x64xf32>
    %cst = arith.constant dense<0.000000e+00> : vector<8x64xf32>
    %10 = tpu.matmul %8, %9, %cst {dimension_numbers = #tpu.dot_dimension_numbers<[1], [0], [0], [1], [0, 0, 1, 1], [], []>, precision = #tpu.contract_precision<fp32>} : vector<8x16xf32>, vector<16x64xf32>, vector<8x64xf32> -> vector<8x64xf32>
    %c0_4 = arith.constant 0 : index
    %c0_5 = arith.constant 0 : index
    %11 = vector.load %arg2[%c0_4, %c0_5] : memref<8x64xf32, #tpu.memory_space<vmem>>, vector<8x64xf32>
    %12 = arith.subf %11, %10 : vector<8x64xf32>
    %13 = arith.mulf %12, %12 : vector<8x64xf32>
    %cst_6 = arith.constant dense<0.000000e+00> : vector<8xf32>
    %14 = vector.multi_reduction <add>, %13, %cst_6 [1] : vector<8x64xf32> to vector<8xf32>
    %15 = vector.shape_cast %14 : vector<8xf32> to vector<8x1xf32>
    %cst_7 = arith.constant 9.99999996E-13 : f32
    %cst_8 = arith.constant 9.99999995E+11 : f32
    %16 = vector.broadcast %cst_7 : f32 to vector<8x1xf32>
    %17 = arith.maximumf %16, %15 : vector<8x1xf32>
    %18 = vector.broadcast %cst_8 : f32 to vector<8x1xf32>
    %19 = arith.minimumf %18, %17 : vector<8x1xf32>
    %c1_i32 = arith.constant 1 : i32
    %20 = arith.muli %arg0, %c1_i32 : i32
    %21 = arith.addi %20, %arg1 : i32
    %c8_i32 = arith.constant 8 : i32
    %22 = arith.muli %21, %c8_i32 : i32
    %23 = tpu.iota {dimensions = array<i32: 0>} : vector<8x1xi32>
    %24 = vector.broadcast %22 : i32 to vector<8x1xi32>
    %25 = arith.addi %24, %23 : vector<8x1xi32>
    %c0_9 = arith.constant 0 : index
    %c0_10 = arith.constant 0 : index
    %26 = vector.load %arg6[%c0_9, %c0_10] : memref<8x1xf32, #tpu.memory_space<vmem>>, vector<8x1xf32>
    %c8_i32_11 = arith.constant 8 : i32
    %27 = vector.broadcast %c8_i32_11 : i32 to vector<8x1xi32>
    %28 = arith.cmpi slt, %25, %27 : vector<8x1xi32>
    %cst_12 = arith.constant 0.000000e+00 : f32
    %29 = vector.broadcast %cst_12 : f32 to vector<8x1xf32>
    %30 = arith.select %28, %19, %29 : vector<8x1xi1>, vector<8x1xf32>
    %31 = arith.addf %26, %30 : vector<8x1xf32>
    %c0_13 = arith.constant 0 : index
    %c0_14 = arith.constant 0 : index
    %32 = vector.load %arg6[%c0_13, %c0_14] : memref<8x1xf32, #tpu.memory_space<vmem>>, vector<8x1xf32>
    tpu.vector_store %arg6[%c0_13, %c0_14], %31 {strides = array<i32>} : memref<8x1xf32, #tpu.memory_space<vmem>>, vector<8x1xf32>,
    %c0_i32_15 = arith.constant 0 : i32
    %33 = arith.cmpi eq, %arg1, %c0_i32_15 : i32
    %34 = arith.extui %33 : i1 to i32
    %c0_i32_16 = arith.constant 0 : i32
    %35 = arith.cmpi ne, %34, %c0_i32_16 : i32
    scf.if %35 {
      %c0_17 = arith.constant 0 : index
      %c0_18 = arith.constant 0 : index
      %36 = vector.load %arg6[%c0_17, %c0_18] : memref<8x1xf32, #tpu.memory_space<vmem>>, vector<8x1xf32>
      %37 = vector.shape_cast %36 : vector<8x1xf32> to vector<1x8x1xf32>
      %cst_19 = arith.constant dense<0.000000e+00> : vector<1xf32>
      %38 = vector.multi_reduction <add>, %37, %cst_19 [1, 2] : vector<1x8x1xf32> to vector<1xf32>
      %39 = vector.shape_cast %38 : vector<1xf32> to vector<1x1x1xf32>
      %40 = vector.extract %39[0, 0, 0] : f32 from vector<1x1x1xf32>
      %41 = vector.broadcast %40 : f32 to vector<1x1xf32>
      %42 = vector.shape_cast %41 : vector<1x1xf32> to vector<1x1x1xf32>
      %c0_20 = arith.constant 0 : index
      %c0_21 = arith.constant 0 : index
      %c0_22 = arith.constant 0 : index
      %43 = vector.load %arg5[%c0_20, %c0_21, %c0_22] : memref<1x1x1xf32, #tpu.memory_space<vmem>>, vector<1x1x1xf32>
      tpu.vector_store %arg5[%c0_20, %c0_21, %c0_22], %42 {strides = array<i32>} : memref<1x1x1xf32, #tpu.memory_space<vmem>>, vector<1x1x1xf32>,
    } else {
    }
    return
  }
  func.func @transform_0(%arg0: i32, %arg1: i32) -> (i32, i32) {
    %c1_i32 = arith.constant 1 : i32
    %0 = arith.muli %arg0, %c1_i32 : i32
    %1 = arith.addi %0, %arg1 : i32
    %c0_i32 = arith.constant 0 : i32
    %2 = arith.minsi %1, %c0_i32 : i32
    %c0_i32_0 = arith.constant 0 : i32
    %c0_i32_1 = arith.constant 0 : i32
    return %2, %c0_i32_0 : i32, i32
  }
  func.func @transform_1(%arg0: i32, %arg1: i32) -> (i32, i32) {
    %c1_i32 = arith.constant 1 : i32
    %0 = arith.muli %arg0, %c1_i32 : i32
    %1 = arith.addi %0, %arg1 : i32
    %c0_i32 = arith.constant 0 : i32
    %c0_i32_0 = arith.constant 0 : i32
    return %1, %c0_i32 : i32, i32
  }
  func.func @transform_2(%arg0: i32, %arg1: i32) -> (i32, i32) {
    %c0_i32 = arith.constant 0 : i32
    %c0_i32_0 = arith.constant 0 : i32
    %c0_i32_1 = arith.constant 0 : i32
    return %c0_i32, %c0_i32_0 : i32, i32
  }
  func.func @transform_3(%arg0: i32, %arg1: i32) -> (i32, i32, i32) {
    %c0_i32 = arith.constant 0 : i32
    %c0_i32_0 = arith.constant 0 : i32
    %c0_i32_1 = arith.constant 0 : i32
    return %arg0, %c0_i32, %c0_i32_0 : i32, i32, i32
  }
}

</mosaic_0001>

<llo_original>
// kernel: tpu_custom_call.1
$region0: #{tpu_custom_call.1}
  #allocation0 [shape = 'u32[]', space=smem, size = 0x4, offset = 0x4, fixed_abs, tag = 'smem constant byte address 0x4 - core index']
  #allocation1 [shape = 'u32[144,128]{1,0:T(1,128)}', space=vmem, size = 0x12000, scoped, tag = 'internal scratch']
  #allocation2 [shape = 'f32[8,1]{1,0:T(8,128)}', space=vmem, size = 0x1000, scoped, tag = 'scratch operand']
  %s0 = inlined_call_operand.hbm [shape: f32[8,64], index: 0, kind: input, shape index: {}]
  %s1 = inlined_call_operand.vmem [shape: s32[8,1], index: 1, kind: input, shape index: {}]
  %s2 = inlined_call_operand.vmem [shape: f32[16,64], index: 2, kind: input, shape index: {}]
  %s3 = inlined_call_operand.hbm [shape: f32[1,1,1], index: 3, kind: output, shape index: {}]
  %s4 = sld [smem:[#allocation0]]
  $region34: #{tpu_custom_call.1} parent=0
    _
  %s6 = ssub.s32 1, %s4
  %s7 = scalar_select 0, %s6, %s4
  $region1: #{tpu_custom_call.1} parent=0
    #allocation3 [shape = 'u8[4096]{0}', space=vmem, size = 0x1000, scoped, tag = 'input window, operand 0, single buffered']
    #allocation4 [shape = 's32[1]{0}', space=sflag, size = 0x4, scoped, tag = 'scoped memory for tpu_custom_call.1']
    #allocation5 [shape = 's32[1]{0}', space=sflag, size = 0x4, scoped, tag = 'scoped memory for tpu_custom_call.1']
    #allocation6 [shape = 'u8[512]{0}', space=vmem, size = 0x400, scoped, tag = 'output window, operand 0, single buffered']
    %8 = vsyncpa [#allocation4], 0
    %9 = vsyncpa [#allocation5], 0
    // Predicated region
    $region2: #{tpu_custom_call.1} parent=1 // pred_check
      _
    $region3: #{tpu_custom_call.1} parent=1 // pred_check_branch
      %11 = sbr.rel (0) target = $region5
    $region4: #{tpu_custom_call.1} parent=1 // pred_region
      %s12 = sadd.s32 0, 0
      %p13 = scmp.lt.s32.totalorder %s12, 0
      %s14 = scalar_select %p13, %s12, 0
      %s16 = ssub.s32 128, 128
      %17 = vsyncadd [#allocation4], %s16
      %s18 = smul.addr %s14, 128
      %s19 = scalar_lea.hbm %s0, %s18
      %s21 = sshll.u32 [#allocation3], 4
      %s22 = int_to_ptr.vmem [resolvable:$true] %s21
      %24 = dma.hbm_to_vmem [thread:$0]  %s19, 128, %s22, [#allocation4]
    $region5: #{tpu_custom_call.1} parent=1 // pred_fallthru
      _
    // Predicated region
    $region6: #{tpu_custom_call.1} parent=1 // pred_check
      _
    $region7: #{tpu_custom_call.1} parent=1 // pred_check_branch
      %26 = sbr.rel (0) target = $region9
    $region8: #{tpu_custom_call.1} parent=1 // pred_region
      %s27 = sadd.s32 0, 0
      %p28 = scmp.lt.s32.totalorder %s27, 0
      %s29 = scalar_select %p28, %s27, 0
      %s30 = smul.addr %s29, 8
      %s31 = scalar_lea.vmem %s1, %s30
      %s32 = sadd.s32 0, 0
    $region9: #{tpu_custom_call.1} parent=1 // pred_fallthru
      _
    // Predicated region
    $region10: #{tpu_custom_call.1} parent=1 // pred_check
      _
    $region11: #{tpu_custom_call.1} parent=1 // pred_check_branch
      %34 = sbr.rel (0) target = $region13
    $region12: #{tpu_custom_call.1} parent=1 // pred_region
      _
    $region13: #{tpu_custom_call.1} parent=1 // pred_fallthru
      _
    // Predicated region
    $region14: #{tpu_custom_call.1} parent=1 // pred_check
      _
    $region15: #{tpu_custom_call.1} parent=1 // pred_check_branch
      %36 = sbr.rel (0) target = $region17
    $region16: #{tpu_custom_call.1} parent=1 // pred_region
      %37 = dma.done [#allocation4], 128
    $region17: #{tpu_custom_call.1} parent=1 // pred_fallthru
      _
    %s38 = sadd.s32 0, 0
    %p39 = scmp.lt.s32.totalorder %s38, 0
    %s40 = scalar_select %p39, %s38, 0
    %s41 = smul.addr %s40, 8
    %s42 = scalar_lea.vmem %s1, %s41
    %s43 = sadd.s32 0, 0
    %p44 = scmp.lt.s32.totalorder %s43, 0
    %s45 = scalar_select %p44, %s43, 0
    %s46 = sadd.s32 0, 0
    %p47 = scmp.lt.s32.totalorder %s46, 0
    %s48 = scalar_select %p47, %s46, 0
    %s49 = smul.addr %s48, 8
    %s50 = scalar_lea.vmem %s1, %s49
    %s51 = sadd.s32 0, 0
    %p52 = scmp.eq.s32.totalorder 0, 0
    // Predicated region
    $region18: #{tpu_custom_call.1} parent=1 // pred_check
      %p53 = pneg %p52
    $region19: #{tpu_custom_call.1} parent=1 // pred_check_branch
      %55 = sbr.rel (%p53) target = $region21
    $region20: #{tpu_custom_call.1} parent=1 // pred_region
      %vm56 = vcmask 7168
      %57 = vst.msk [vmem:[#allocation2] sm:$0xff] %vm56, 0.0
    $region21: #{tpu_custom_call.1} parent=1 // pred_fallthru
      _
    %v58 = vld [vmem:[%s50] sm:$0xff]
    %v59 = vlaneseq
    %v60 = vand.u32 %v59, 127
    %61 = vset.pattern.permute.xlu0 0
    %62 = vperm.xlu0 %61, %v58
    %v63 = vpop.permute.xlu0 %62
    %vm64 = vcmp.eq.s32.totalorder %v63, %v60
    %v65 = vsel %vm64, 1, 0
    %v66 = vcvt.s32.f32 %v65
    %v67 = vld [vmem:[%s2] sm:$0xff]
    %v68 = vld [vmem:[%s2 + $0x8] sm:$0xff]
    %vm69 = vcmask 130048
    %v71 = vsel %vm69, %v66, 0
    %73 = vmatprep.subr.mxu0 0.0
    %v74 = vand.u32 %v67, 4294901760
    %75 = vmatpush1.msra.mxu0 %v74
    %76 = vmatprep.subr.mxu0 0.0
    %v77 = vand.u32 %v68, 4294901760
    %78 = vmatpush1.msra.mxu0 %v77
    %79 = vmatprep.subr.mxu0 0.0
    %80 = vmatpush1.msra.mxu0 0.0
    %81 = vmatprep.subr.mxu0 0.0
    %82 = vmatpush1.msra.mxu0 0.0
    %83 = vmatprep.subr.mxu0 0.0
    %84 = vmatpush1.msra.mxu0 0.0
    %85 = vmatprep.subr.mxu0 0.0
    %86 = vmatpush1.msra.mxu0 0.0
    %87 = vmatprep.subr.mxu0 0.0
    %88 = vmatpush1.msra.mxu0 0.0
    %89 = vmatprep.subr.mxu0 0.0
    %90 = vmatpush1.msra.mxu0 0.0
    %91 = vmatprep.subr.mxu0 0.0
    %92 = vmatpush1.msra.mxu0 0.0
    %93 = vmatprep.subr.mxu0 0.0
    %94 = vmatpush1.msra.mxu0 0.0
    %95 = vmatprep.subr.mxu0 0.0
    %96 = vmatpush1.msra.mxu0 0.0
    %97 = vmatprep.subr.mxu0 0.0
    %98 = vmatpush1.msra.mxu0 0.0
    %99 = vmatprep.subr.mxu0 0.0
    %100 = vmatpush1.msra.mxu0 0.0
    %101 = vmatprep.subr.mxu0 0.0
    %102 = vmatpush1.msra.mxu0 0.0
    %103 = vmatprep.subr.mxu0 0.0
    %104 = vmatpush1.msra.mxu0 0.0
    %105 = vmatprep.subr.mxu0 0.0
    %106 = vmatpush1.msra.mxu0 0.0
    %107 = vmatprep.subr.mxu0 0.0
    %108 = vmatpush1.msra.mxu0 0.0
    %109 = vmatprep.subr.mxu0 0.0
    %110 = vmatpush1.msra.mxu0 0.0
    %111 = vmatprep.subr.mxu0 0.0
    %112 = vmatpush1.msra.mxu0 0.0
    %113 = vmatprep.subr.mxu0 0.0
    %114 = vmatpush1.msra.mxu0 0.0
    %115 = vmatprep.subr.mxu0 0.0
    %116 = vmatpush1.msra.mxu0 0.0
    %117 = vmatprep.subr.mxu0 0.0
    %118 = vmatpush1.msra.mxu0 0.0
    %119 = vmatprep.subr.mxu0 0.0
    %120 = vmatpush1.msra.mxu0 0.0
    %121 = vmatprep.subr.mxu0 0.0
    %122 = vmatpush1.msra.mxu0 0.0
    %123 = vmatprep.subr.mxu0 0.0
    %124 = vmatpush1.msra.mxu0 0.0
    %125 = vmatprep.subr.mxu0 0.0
    %126 = vmatpush1.msra.mxu0 0.0
    %127 = vmatprep.subr.mxu0 0.0
    %128 = vmatpush1.msra.mxu0 0.0
    %129 = vmatprep.subr.mxu0 0.0
    %130 = vmatpush1.msra.mxu0 0.0
    %131 = vmatprep.subr.mxu0 0.0
    %132 = vmatpush1.msra.mxu0 0.0
    %133 = vmatprep.subr.mxu0 0.0
    %134 = vmatpush1.msra.mxu0 0.0
    %135 = vmatprep.subr.mxu0 0.0
    %136 = vmatpush1.msra.mxu0 0.0
    %137 = vmatprep.subr.mxu0 0.0
    %138 = vmatpush1.msra.mxu0 0.0
    %139 = vmatprep.mubr.f32.mxu0 0.0
    %v140 = vand.u32 %v71, 4294901760
    %v141 = vsub.f32 %v71, %v140
    %v142 = vand.u32 %v141, 4294901760
    %v143 = vsub.f32 %v141, %v142
    %v144 = vand.u32 %v143, 4294901760
    %145 = vmatmul.mubr.f32.gmra.mrb[0].mxu0 %v144
    %v146 = vpop.f32.mrb[0].mxu0
    %v147 = vadd.f32 0.0, %v146
    %v148 = vpop.f32.mrb[0].mxu0
    %149 = vdwg.mxu0
    %150 = vmatprep.subr.mxu0 0.0
    %v151 = vand.u32 %v67, 4294901760
    %v152 = vsub.f32 %v67, %v151
    %v153 = vand.u32 %v152, 4294901760
    %v154 = vsub.f32 %v152, %v153
    %v155 = vand.u32 %v154, 4294901760
    %156 = vmatpush1.msra.mxu0 %v155
    %157 = vmatprep.subr.mxu0 0.0
    %v158 = vand.u32 %v68, 4294901760
    %v159 = vsub.f32 %v68, %v158
    %v160 = vand.u32 %v159, 4294901760
    %v161 = vsub.f32 %v159, %v160
    %v162 = vand.u32 %v161, 4294901760
    %163 = vmatpush1.msra.mxu0 %v162
    %164 = vmatprep.subr.mxu0 0.0
    %165 = vmatpush1.msra.mxu0 0.0
    %166 = vmatprep.subr.mxu0 0.0
    %167 = vmatpush1.msra.mxu0 0.0
    %168 = vmatprep.subr.mxu0 0.0
    %169 = vmatpush1.msra.mxu0 0.0
    %170 = vmatprep.subr.mxu0 0.0
    %171 = vmatpush1.msra.mxu0 0.0
    %172 = vmatprep.subr.mxu0 0.0
    %173 = vmatpush1.msra.mxu0 0.0
    %174 = vmatprep.subr.mxu0 0.0
    %175 = vmatpush1.msra.mxu0 0.0
    %176 = vmatprep.subr.mxu0 0.0
    %177 = vmatpush1.msra.mxu0 0.0
    %178 = vmatprep.subr.mxu0 0.0
    %179 = vmatpush1.msra.mxu0 0.0
    %180 = vmatprep.subr.mxu0 0.0
    %181 = vmatpush1.msra.mxu0 0.0
    %182 = vmatprep.subr.mxu0 0.0
    %183 = vmatpush1.msra.mxu0 0.0
    %184 = vmatprep.subr.mxu0 0.0
    %185 = vmatpush1.msra.mxu0 0.0
    %186 = vmatprep.subr.mxu0 0.0
    %187 = vmatpush1.msra.mxu0 0.0
    %188 = vmatprep.subr.mxu0 0.0
    %189 = vmatpush1.msra.mxu0 0.0
    %190 = vmatprep.subr.mxu0 0.0
    %191 = vmatpush1.msra.mxu0 0.0
    %192 = vmatprep.subr.mxu0 0.0
    %193 = vmatpush1.msra.mxu0 0.0
    %194 = vmatprep.subr.mxu0 0.0
    %195 = vmatpush1.msra.mxu0 0.0
    %196 = vmatprep.subr.mxu0 0.0
    %197 = vmatpush1.msra.mxu0 0.0
    %198 = vmatprep.subr.mxu0 0.0
    %199 = vmatpush1.msra.mxu0 0.0
    %200 = vmatprep.subr.mxu0 0.0
    %201 = vmatpush1.msra.mxu0 0.0
    %202 = vmatprep.subr.mxu0 0.0
    %203 = vmatpush1.msra.mxu0 0.0
    %204 = vmatprep.subr.mxu0 0.0
    %205 = vmatpush1.msra.mxu0 0.0
    %206 = vmatprep.subr.mxu0 0.0
    %207 = vmatpush1.msra.mxu0 0.0
    %208 = vmatprep.subr.mxu0 0.0
    %209 = vmatpush1.msra.mxu0 0.0
    %210 = vmatprep.subr.mxu0 0.0
    %211 = vmatpush1.msra.mxu0 0.0
    %212 = vmatprep.subr.mxu0 0.0
    %213 = vmatpush1.msra.mxu0 0.0
    %214 = vmatprep.subr.mxu0 0.0
    %215 = vmatpush1.msra.mxu0 0.0
    %216 = vmatprep.subr.mxu0 0.0
    %217 = vmatpush1.msra.mxu0 0.0
    %218 = vmatprep.subr.mxu0 0.0
    %219 = vmatpush1.msra.mxu0 0.0
    %220 = vmatprep.subr.mxu0 0.0
    %221 = vmatpush1.msra.mxu0 0.0
    %222 = vmatprep.subr.mxu0 0.0
    %223 = vmatpush1.msra.mxu0 0.0
    %224 = vmatprep.mubr.f32.mxu0 0.0
    %v225 = vand.u32 %v71, 4294901760
    %226 = vmatmul.mubr.f32.gmra.mrb[0].mxu0 %v225
    %v227 = vpop.f32.mrb[0].mxu0
    %v228 = vadd.f32 %v147, %v227
    %v229 = vpop.f32.mrb[0].mxu0
    %230 = vdwg.mxu0
    %231 = vmatprep.subr.mxu0 0.0
    %v232 = vand.u32 %v67, 4294901760
    %v233 = vsub.f32 %v67, %v232
    %234 = vmatpush1.msra.mxu0 %v233
    %235 = vmatprep.subr.mxu0 0.0
    %v236 = vand.u32 %v68, 4294901760
    %v237 = vsub.f32 %v68, %v236
    %238 = vmatpush1.msra.mxu0 %v237
    %239 = vmatprep.subr.mxu0 0.0
    %240 = vmatpush1.msra.mxu0 0.0
    %241 = vmatprep.subr.mxu0 0.0
    %242 = vmatpush1.msra.mxu0 0.0
    %243 = vmatprep.subr.mxu0 0.0
    %244 = vmatpush1.msra.mxu0 0.0
    %245 = vmatprep.subr.mxu0 0.0
    %246 = vmatpush1.msra.mxu0 0.0
    %247 = vmatprep.subr.mxu0 0.0
    %248 = vmatpush1.msra.mxu0 0.0
    %249 = vmatprep.subr.mxu0 0.0
    %250 = vmatpush1.msra.mxu0 0.0
    %251 = vmatprep.subr.mxu0 0.0
    %252 = vmatpush1.msra.mxu0 0.0
    %253 = vmatprep.subr.mxu0 0.0
    %254 = vmatpush1.msra.mxu0 0.0
    %255 = vmatprep.subr.mxu0 0.0
    %256 = vmatpush1.msra.mxu0 0.0
    %257 = vmatprep.subr.mxu0 0.0
    %258 = vmatpush1.msra.mxu0 0.0
    %259 = vmatprep.subr.mxu0 0.0
    %260 = vmatpush1.msra.mxu0 0.0
    %261 = vmatprep.subr.mxu0 0.0
    %262 = vmatpush1.msra.mxu0 0.0
    %263 = vmatprep.subr.mxu0 0.0
    %264 = vmatpush1.msra.mxu0 0.0
    %265 = vmatprep.subr.mxu0 0.0
    %266 = vmatpush1.msra.mxu0 0.0
    %267 = vmatprep.subr.mxu0 0.0
    %268 = vmatpush1.msra.mxu0 0.0
    %269 = vmatprep.subr.mxu0 0.0
    %270 = vmatpush1.msra.mxu0 0.0
    %271 = vmatprep.subr.mxu0 0.0
    %272 = vmatpush1.msra.mxu0 0.0
    %273 = vmatprep.subr.mxu0 0.0
    %274 = vmatpush1.msra.mxu0 0.0
    %275 = vmatprep.subr.mxu0 0.0
    %276 = vmatpush1.msra.mxu0 0.0
    %277 = vmatprep.subr.mxu0 0.0
    %278 = vmatpush1.msra.mxu0 0.0
    %279 = vmatprep.subr.mxu0 0.0
    %280 = vmatpush1.msra.mxu0 0.0
    %281 = vmatprep.subr.mxu0 0.0
    %282 = vmatpush1.msra.mxu0 0.0
    %283 = vmatprep.subr.mxu0 0.0
    %284 = vmatpush1.msra.mxu0 0.0
    %285 = vmatprep.subr.mxu0 0.0
    %286 = vmatpush1.msra.mxu0 0.0
    %287 = vmatprep.subr.mxu0 0.0
    %288 = vmatpush1.msra.mxu0 0.0
    %289 = vmatprep.subr.mxu0 0.0
    %290 = vmatpush1.msra.mxu0 0.0
    %291 = vmatprep.subr.mxu0 0.0
    %292 = vmatpush1.msra.mxu0 0.0
    %293 = vmatprep.subr.mxu0 0.0
    %294 = vmatpush1.msra.mxu0 0.0
    %295 = vmatprep.subr.mxu0 0.0
    %296 = vmatpush1.msra.mxu0 0.0
    %297 = vmatprep.subr.mxu0 0.0
    %298 = vmatpush1.msra.mxu0 0.0
    %299 = vmatprep.mubr.f32.mxu0 0.0
    %v300 = vand.u32 %v71, 4294901760
    %v301 = vsub.f32 %v71, %v300
    %302 = vmatmul.mubr.f32.gmra.mrb[0].mxu0 %v301
    %v303 = vpop.f32.mrb[0].mxu0
    %v304 = vadd.f32 %v228, %v303
    %v305 = vpop.f32.mrb[0].mxu0
    %306 = vdwg.mxu0
    %307 = vmatprep.subr.mxu0 0.0
    %v308 = vand.u32 %v67, 4294901760
    %309 = vmatpush1.msra.mxu0 %v308
    %310 = vmatprep.subr.mxu0 0.0
    %v311 = vand.u32 %v68, 4294901760
    %312 = vmatpush1.msra.mxu0 %v311
    %313 = vmatprep.subr.mxu0 0.0
    %314 = vmatpush1.msra.mxu0 0.0
    %315 = vmatprep.subr.mxu0 0.0
    %316 = vmatpush1.msra.mxu0 0.0
    %317 = vmatprep.subr.mxu0 0.0
    %318 = vmatpush1.msra.mxu0 0.0
    %319 = vmatprep.subr.mxu0 0.0
    %320 = vmatpush1.msra.mxu0 0.0
    %321 = vmatprep.subr.mxu0 0.0
    %322 = vmatpush1.msra.mxu0 0.0
    %323 = vmatprep.subr.mxu0 0.0
    %324 = vmatpush1.msra.mxu0 0.0
    %325 = vmatprep.subr.mxu0 0.0
    %326 = vmatpush1.msra.mxu0 0.0
    %327 = vmatprep.subr.mxu0 0.0
    %328 = vmatpush1.msra.mxu0 0.0
    %329 = vmatprep.subr.mxu0 0.0
    %330 = vmatpush1.msra.mxu0 0.0
    %331 = vmatprep.subr.mxu0 0.0
    %332 = vmatpush1.msra.mxu0 0.0
    %333 = vmatprep.subr.mxu0 0.0
    %334 = vmatpush1.msra.mxu0 0.0
    %335 = vmatprep.subr.mxu0 0.0
    %336 = vmatpush1.msra.mxu0 0.0
    %337 = vmatprep.subr.mxu0 0.0
    %338 = vmatpush1.msra.mxu0 0.0
    %339 = vmatprep.subr.mxu0 0.0
    %340 = vmatpush1.msra.mxu0 0.0
    %341 = vmatprep.subr.mxu0 0.0
    %342 = vmatpush1.msra.mxu0 0.0
    %343 = vmatprep.subr.mxu0 0.0
    %344 = vmatpush1.msra.mxu0 0.0
    %345 = vmatprep.subr.mxu0 0.0
    %346 = vmatpush1.msra.mxu0 0.0
    %347 = vmatprep.subr.mxu0 0.0
    %348 = vmatpush1.msra.mxu0 0.0
    %349 = vmatprep.subr.mxu0 0.0
    %350 = vmatpush1.msra.mxu0 0.0
    %351 = vmatprep.subr.mxu0 0.0
    %352 = vmatpush1.msra.mxu0 0.0
    %353 = vmatprep.subr.mxu0 0.0
    %354 = vmatpush1.msra.mxu0 0.0
    %355 = vmatprep.subr.mxu0 0.0
    %356 = vmatpush1.msra.mxu0 0.0
    %357 = vmatprep.subr.mxu0 0.0
    %358 = vmatpush1.msra.mxu0 0.0
    %359 = vmatprep.subr.mxu0 0.0
    %360 = vmatpush1.msra.mxu0 0.0
    %361 = vmatprep.subr.mxu0 0.0
    %362 = vmatpush1.msra.mxu0 0.0
    %363 = vmatprep.subr.mxu0 0.0
    %364 = vmatpush1.msra.mxu0 0.0
    %365 = vmatprep.subr.mxu0 0.0
    %366 = vmatpush1.msra.mxu0 0.0
    %367 = vmatprep.subr.mxu0 0.0
    %368 = vmatpush1.msra.mxu0 0.0
    %369 = vmatprep.subr.mxu0 0.0
    %370 = vmatpush1.msra.mxu0 0.0
    %371 = vmatprep.subr.mxu0 0.0
    %372 = vmatpush1.msra.mxu0 0.0
    %373 = vmatprep.mubr.f32.mxu0 0.0
    %v374 = vand.u32 %v71, 4294901760
    %v375 = vsub.f32 %v71, %v374
    %v376 = vand.u32 %v375, 4294901760
    %377 = vmatmul.mubr.f32.gmra.mrb[0].mxu0 %v376
    %v378 = vpop.f32.mrb[0].mxu0
    %v379 = vadd.f32 %v304, %v378
    %v380 = vpop.f32.mrb[0].mxu0
    %381 = vdwg.mxu0
    %382 = vmatprep.subr.mxu0 0.0
    %v383 = vand.u32 %v67, 4294901760
    %v384 = vsub.f32 %v67, %v383
    %v385 = vand.u32 %v384, 4294901760
    %386 = vmatpush1.msra.mxu0 %v385
    %387 = vmatprep.subr.mxu0 0.0
    %v388 = vand.u32 %v68, 4294901760
    %v389 = vsub.f32 %v68, %v388
    %v390 = vand.u32 %v389, 4294901760
    %391 = vmatpush1.msra.mxu0 %v390
    %392 = vmatprep.subr.mxu0 0.0
    %393 = vmatpush1.msra.mxu0 0.0
    %394 = vmatprep.subr.mxu0 0.0
    %395 = vmatpush1.msra.mxu0 0.0
    %396 = vmatprep.subr.mxu0 0.0
    %397 = vmatpush1.msra.mxu0 0.0
    %398 = vmatprep.subr.mxu0 0.0
    %399 = vmatpush1.msra.mxu0 0.0
    %400 = vmatprep.subr.mxu0 0.0
    %401 = vmatpush1.msra.mxu0 0.0
    %402 = vmatprep.subr.mxu0 0.0
    %403 = vmatpush1.msra.mxu0 0.0
    %404 = vmatprep.subr.mxu0 0.0
    %405 = vmatpush1.msra.mxu0 0.0
    %406 = vmatprep.subr.mxu0 0.0
    %407 = vmatpush1.msra.mxu0 0.0
    %408 = vmatprep.subr.mxu0 0.0
    %409 = vmatpush1.msra.mxu0 0.0
    %410 = vmatprep.subr.mxu0 0.0
    %411 = vmatpush1.msra.mxu0 0.0
    %412 = vmatprep.subr.mxu0 0.0
    %413 = vmatpush1.msra.mxu0 0.0
    %414 = vmatprep.subr.mxu0 0.0
    %415 = vmatpush1.msra.mxu0 0.0
    %416 = vmatprep.subr.mxu0 0.0
    %417 = vmatpush1.msra.mxu0 0.0
    %418 = vmatprep.subr.mxu0 0.0
    %419 = vmatpush1.msra.mxu0 0.0
    %420 = vmatprep.subr.mxu0 0.0
    %421 = vmatpush1.msra.mxu0 0.0
    %422 = vmatprep.subr.mxu0 0.0
    %423 = vmatpush1.msra.mxu0 0.0
    %424 = vmatprep.subr.mxu0 0.0
    %425 = vmatpush1.msra.mxu0 0.0
    %426 = vmatprep.subr.mxu0 0.0
    %427 = vmatpush1.msra.mxu0 0.0
    %428 = vmatprep.subr.mxu0 0.0
    %429 = vmatpush1.msra.mxu0 0.0
    %430 = vmatprep.subr.mxu0 0.0
    %431 = vmatpush1.msra.mxu0 0.0
    %432 = vmatprep.subr.mxu0 0.0
    %433 = vmatpush1.msra.mxu0 0.0
    %434 = vmatprep.subr.mxu0 0.0
    %435 = vmatpush1.msra.mxu0 0.0
    %436 = vmatprep.subr.mxu0 0.0
    %437 = vmatpush1.msra.mxu0 0.0
    %438 = vmatprep.subr.mxu0 0.0
    %439 = vmatpush1.msra.mxu0 0.0
    %440 = vmatprep.subr.mxu0 0.0
    %441 = vmatpush1.msra.mxu0 0.0
    %442 = vmatprep.subr.mxu0 0.0
    %443 = vmatpush1.msra.mxu0 0.0
    %444 = vmatprep.subr.mxu0 0.0
    %445 = vmatpush1.msra.mxu0 0.0
    %446 = vmatprep.subr.mxu0 0.0
    %447 = vmatpush1.msra.mxu0 0.0
    %448 = vmatprep.subr.mxu0 0.0
    %449 = vmatpush1.msra.mxu0 0.0
    %450 = vmatprep.subr.mxu0 0.0
    %451 = vmatpush1.msra.mxu0 0.0
    %452 = vmatprep.mubr.f32.mxu0 0.0
    %v453 = vand.u32 %v71, 4294901760
    %454 = vmatmul.mubr.f32.gmra.mrb[0].mxu0 %v453
    %v455 = vpop.f32.mrb[0].mxu0
    %v456 = vadd.f32 %v379, %v455
    %v457 = vpop.f32.mrb[0].mxu0
    %458 = vdwg.mxu0
    %459 = vmatprep.subr.mxu0 0.0
    %v460 = vand.u32 %v67, 4294901760
    %461 = vmatpush1.msra.mxu0 %v460
    %462 = vmatprep.subr.mxu0 0.0
    %v463 = vand.u32 %v68, 4294901760
    %464 = vmatpush1.msra.mxu0 %v463
    %465 = vmatprep.subr.mxu0 0.0
    %466 = vmatpush1.msra.mxu0 0.0
    %467 = vmatprep.subr.mxu0 0.0
    %468 = vmatpush1.msra.mxu0 0.0
    %469 = vmatprep.subr.mxu0 0.0
    %470 = vmatpush1.msra.mxu0 0.0
    %471 = vmatprep.subr.mxu0 0.0
    %472 = vmatpush1.msra.mxu0 0.0
    %473 = vmatprep.subr.mxu0 0.0
    %474 = vmatpush1.msra.mxu0 0.0
    %475 = vmatprep.subr.mxu0 0.0
    %476 = vmatpush1.msra.mxu0 0.0
    %477 = vmatprep.subr.mxu0 0.0
    %478 = vmatpush1.msra.mxu0 0.0
    %479 = vmatprep.subr.mxu0 0.0
    %480 = vmatpush1.msra.mxu0 0.0
    %481 = vmatprep.subr.mxu0 0.0
    %482 = vmatpush1.msra.mxu0 0.0
    %483 = vmatprep.subr.mxu0 0.0
    %484 = vmatpush1.msra.mxu0 0.0
    %485 = vmatprep.subr.mxu0 0.0
    %486 = vmatpush1.msra.mxu0 0.0
    %487 = vmatprep.subr.mxu0 0.0
    %488 = vmatpush1.msra.mxu0 0.0
    %489 = vmatprep.subr.mxu0 0.0
    %490 = vmatpush1.msra.mxu0 0.0
    %491 = vmatprep.subr.mxu0 0.0
    %492 = vmatpush1.msra.mxu0 0.0
    %493 = vmatprep.subr.mxu0 0.0
    %494 = vmatpush1.msra.mxu0 0.0
    %495 = vmatprep.subr.mxu0 0.0
    %496 = vmatpush1.msra.mxu0 0.0
    %497 = vmatprep.subr.mxu0 0.0
    %498 = vmatpush1.msra.mxu0 0.0
    %499 = vmatprep.subr.mxu0 0.0
    %500 = vmatpush1.msra.mxu0 0.0
    %501 = vmatprep.subr.mxu0 0.0
    %502 = vmatpush1.msra.mxu0 0.0
    %503 = vmatprep.subr.mxu0 0.0
    %504 = vmatpush1.msra.mxu0 0.0
    %505 = vmatprep.subr.mxu0 0.0
    %506 = vmatpush1.msra.mxu0 0.0
    %507 = vmatprep.subr.mxu0 0.0
    %508 = vmatpush1.msra.mxu0 0.0
    %509 = vmatprep.subr.mxu0 0.0
    %510 = vmatpush1.msra.mxu0 0.0
    %511 = vmatprep.subr.mxu0 0.0
    %512 = vmatpush1.msra.mxu0 0.0
    %513 = vmatprep.subr.mxu0 0.0
    %514 = vmatpush1.msra.mxu0 0.0
    %515 = vmatprep.subr.mxu0 0.0
    %516 = vmatpush1.msra.mxu0 0.0
    %517 = vmatprep.subr.mxu0 0.0
    %518 = vmatpush1.msra.mxu0 0.0
    %519 = vmatprep.subr.mxu0 0.0
    %520 = vmatpush1.msra.mxu0 0.0
    %521 = vmatprep.subr.mxu0 0.0
    %522 = vmatpush1.msra.mxu0 0.0
    %523 = vmatprep.subr.mxu0 0.0
    %524 = vmatpush1.msra.mxu0 0.0
    %525 = vmatprep.mubr.f32.mxu0 0.0
    %v526 = vand.u32 %v71, 4294901760
    %527 = vmatmul.mubr.f32.gmra.mrb[0].mxu0 %v526
    %v528 = vpop.f32.mrb[0].mxu0
    %v529 = vadd.f32 %v456, %v528
    %v530 = vpop.f32.mrb[0].mxu0
    %531 = vdwg.mxu0
    %v532 = vld [vmem:[#allocation3] sm:$0xff]
    %v533 = vsub.f32 %v532, %v529
    %v534 = vmul.f32 %v533, %v533
    %vm535 = vcmask 523264
    %v536 = vsel %vm535, %v534, 0.0
    %537 = vadd.xlane.f32.xlu0 %v536
    %v538 = vpop.xlane.xlu0 %537
    %v539 = vmax.f32 %v538, 1e-12
    %v540 = vmin.f32 %v539, 1e+12
    %s541 = sadd.s32 0, 0
    %s542 = smul.u32 %s541, 8
    %v543 = vlaneseq
    %v544 = vshrl.u32 %v543, 7
    %v545 = vstv %s542
    %v546 = vadd.s32 %v545, %v544
    %v547 = vld [vmem:[#allocation2] sm:$0xff]
    %vm548 = vcmp.lt.s32.totalorder %v546, 8
    %v549 = vsel %vm548, %v540, 0.0
    %v550 = vadd.f32 %v547, %v549
    %vm551 = vcmask 7168
    %552 = vst.msk [vmem:[#allocation2] sm:$0xff] %vm551, %v550
    // Predicated region
    $region22: #{tpu_custom_call.1} parent=1 // pred_check
      %p553 = pneg %p52
    $region23: #{tpu_custom_call.1} parent=1 // pred_check_branch
      %555 = sbr.rel (%p553) target = $region25
    $region24: #{tpu_custom_call.1} parent=1 // pred_region
      %v556 = vld [vmem:[#allocation2] sm:$0xff]
      %v557 = vsel %vm551, %v556, 0.0
      %558 = vadd.xlane.f32.xlu0 %v557
      %v559 = vpop.xlane.xlu0 %558
      %v560 = vrot.slane %v559, 4
      %v561 = vadd.f32 %v559, %v560
      %v562 = vrot.slane %v561, 2
      %v563 = vadd.f32 %v561, %v562
      %v564 = vrot.slane %v563, 1
      %v565 = vadd.f32 %v563, %v564
      %s566 = vtos %v565
      %v567 = vstv %s566
      %vm568 = vcmask 0
      %569 = vst.msk [vmem:[#allocation6] sm:$0x1] %vm568, %v567
    $region25: #{tpu_custom_call.1} parent=1 // pred_fallthru
      _
    // Predicated region
    $region26: #{tpu_custom_call.1} parent=1 // pred_check
      _
    $region27: #{tpu_custom_call.1} parent=1 // pred_check_branch
      %571 = sbr.rel (0) target = $region29
    $region28: #{tpu_custom_call.1} parent=1 // pred_region
      %s573 = ssub.s32 16, 16
      %574 = vsyncadd [#allocation5], %s573
      %s576 = sshll.u32 [#allocation6], 4
      %s577 = int_to_ptr.vmem [resolvable:$true] %s576
      %579 = dma.vmem_to_hbm [thread:$0]  %s577, 16, %s3, [#allocation5]
    $region29: #{tpu_custom_call.1} parent=1 // pred_fallthru
      _
    // Predicated region
    $region30: #{tpu_custom_call.1} parent=1 // pred_check
      _
    $region31: #{tpu_custom_call.1} parent=1 // pred_check_branch
      %581 = sbr.rel (0) target = $region33
    $region32: #{tpu_custom_call.1} parent=1 // pred_region
      %582 = dma.done [#allocation5], 16
    $region33: #{tpu_custom_call.1} parent=1 // pred_fallthru
      _
    %583 = vsyncpa [#allocation4], 1
    %584 = vsyncpa [#allocation5], 1

</llo_original>
